<compile_context>
chip_gen: v6e
topology: v6e:2x2x1
jax: 0.10.0
libtpu: 0.0.40
codegen_flags: <defaults>
</compile_context>

<pallas_src>
import jax
import jax.numpy as jnp
from jax.experimental import pallas as pl
from jax.experimental.pallas import tpu as pltpu


ACT_DTYPE = jnp.bfloat16          # inter-kernel activation dtype
_LN_EPS = 1e-12


# ---------------------------------------------------------------------------
# Pallas kernels (fused per encoder sub-block)
# ---------------------------------------------------------------------------

def _ln_kernel(eps):
    """LayerNorm over the last axis of one [1, S, H] block."""
    def kernel(x_ref, g_ref, b_ref, o_ref):
        x = x_ref[0].astype(jnp.float32)                       # [S, H]
        mu = jnp.mean(x, axis=-1, keepdims=True)
        var = jnp.mean(jnp.square(x - mu), axis=-1, keepdims=True)
        y = (x - mu) * jax.lax.rsqrt(var + eps)
        o_ref[0] = (y * g_ref[...] + b_ref[...]).astype(o_ref.dtype)
    return kernel


def _attn_block_kernel(num_heads, head_dim, eps):
    """Fused: QKV matmul -> per-head attention -> out proj -> +res -> LN1.

    Block layout (per grid step = one batch element):
      x:    [1, S, H]   activations (bf16/f32)
      mask: [1, 1, S]   additive bias (-1e9 on pads), f32
      wqkv: [H, 3H] bf16, bqkv: [1, 3H] f32
      wo:   [H, H]  bf16, bo:   [1, H]  f32
      g/b:  [1, H]  f32 (LayerNorm1)
    """
    H = num_heads * head_dim
    scale = 1.0 / float(head_dim) ** 0.5

    def kernel(x_ref, mask_ref, wqkv_ref, bqkv_ref, wo_ref, bo_ref,
               g_ref, beta_ref, o_ref):
        xb = x_ref[0]                                          # [S, H]
        x32 = xb.astype(jnp.float32)
        mask = mask_ref[0]                                     # [1, S] f32

        # Fused QKV projection (bf16 MXU, f32 accumulate).
        qkv = jnp.dot(xb.astype(jnp.bfloat16), wqkv_ref[...],
                      preferred_element_type=jnp.float32) + bqkv_ref[...]

        # Per-head attention (static unrolled loop; head split happens here,
        # no XLA-side transposes).
        ctx_heads = []
        for h in range(num_heads):
            lo = h * head_dim
            q_h = qkv[:, lo:lo + head_dim]                     # [S, dh] f32
            k_h = qkv[:, H + lo:H + lo + head_dim]
            v_h = qkv[:, 2 * H + lo:2 * H + lo + head_dim]

            s = jnp.dot(q_h.astype(jnp.bfloat16),
                        k_h.T.astype(jnp.bfloat16),
                        preferred_element_type=jnp.float32) * scale
            s = s + mask                                       # [S, S]
            m = jnp.max(s, axis=-1, keepdims=True)
            e = jnp.exp(s - m)                                 # f32 EUP
            denom = jnp.sum(e, axis=-1, keepdims=True)
            p = e * pl.reciprocal(denom, approx=True)          # EUP recip
            ctx_heads.append(
                jnp.dot(p.astype(jnp.bfloat16), v_h.astype(jnp.bfloat16),
                        preferred_element_type=jnp.float32))   # [S, dh]
        ctx = jnp.concatenate(ctx_heads, axis=-1)              # [S, H] f32

        # Output projection + residual + LayerNorm1 (f32 math).
        attn = jnp.dot(ctx.astype(jnp.bfloat16), wo_ref[...],
                       preferred_element_type=jnp.float32) + bo_ref[...]
        y = x32 + attn
        mu = jnp.mean(y, axis=-1, keepdims=True)
        var = jnp.mean(jnp.square(y - mu), axis=-1, keepdims=True)
        yn = (y - mu) * jax.lax.rsqrt(var + eps)
        o_ref[0] = (yn * g_ref[...] + beta_ref[...]).astype(o_ref.dtype)

    return kernel


def _ffn_block_kernel(eps):
    """Fused: w1 + GELU + w2 + residual + LayerNorm2 for one [1, S, H] block."""
    def kernel(x_ref, w1_ref, b1_ref, w2_ref, b2_ref, g_ref, beta_ref, o_ref):
        xb = x_ref[0]                                          # [S, H]
        x32 = xb.astype(jnp.float32)
        h = jnp.dot(xb.astype(jnp.bfloat16), w1_ref[...],
                    preferred_element_type=jnp.float32) + b1_ref[...]
        # TODO(synk): HF BERT uses exact erf GELU; tanh-approx GELU is used
        # here (EUP path, small numerical drift vs the reference).
        h = jax.nn.gelu(h)
        f = jnp.dot(h.astype(jnp.bfloat16), w2_ref[...],
                    preferred_element_type=jnp.float32) + b2_ref[...]
        y = x32 + f
        mu = jnp.mean(y, axis=-1, keepdims=True)
        var = jnp.mean(jnp.square(y - mu), axis=-1, keepdims=True)
        yn = (y - mu) * jax.lax.rsqrt(var + eps)
        o_ref[0] = (yn * g_ref[...] + beta_ref[...]).astype(o_ref.dtype)
    return kernel


# ---------------------------------------------------------------------------
# Pallas wrappers: grid over batch, weights as whole (tiny) blocks
# ---------------------------------------------------------------------------

_PARALLEL = pltpu.CompilerParams(dimension_semantics=("parallel",))


def _batch_spec(S, H):
    return pl.BlockSpec((1, S, H), lambda b: (b, 0, 0))


def _whole_spec(shape):
    nd = len(shape)
    return pl.BlockSpec(shape, lambda b, _n=nd: (0,) * _n)


def pallas_layernorm3d(x, g, b, out_dtype=ACT_DTYPE, eps=_LN_EPS):
    B, S, H = x.shape
    return pl.pallas_call(
        _ln_kernel(eps),
        grid=(B,),
        in_specs=[_batch_spec(S, H), _whole_spec((1, H)), _whole_spec((1, H))],
        out_specs=_batch_spec(S, H),
        out_shape=jax.ShapeDtypeStruct((B, S, H), out_dtype),
        compiler_params=_PARALLEL,
    )(x, g, b)


def attention_block(x, mask_bias, p, num_heads):
    B, S, H = x.shape
    dh = H // num_heads
    return pl.pallas_call(
        _attn_block_kernel(num_heads, dh, _LN_EPS),
        grid=(B,),
        in_specs=[
            _batch_spec(S, H),                                  # x
            pl.BlockSpec((1, 1, S), lambda b: (b, 0, 0)),       # mask bias
            _whole_spec((H, 3 * H)),                            # w_qkv (bf16)
            _whole_spec((1, 3 * H)),                            # b_qkv
            _whole_spec((H, H)),                                # wo (bf16)
            _whole_spec((1, H)),                                # bo
            _whole_spec((1, H)),                                # ln1 gamma
            _whole_spec((1, H)),                                # ln1 beta
        ],
        out_specs=_batch_spec(S, H),
        out_shape=jax.ShapeDtypeStruct((B, S, H), ACT_DTYPE),
        compiler_params=_PARALLEL,
    )(x, mask_bias, p["w_qkv"], p["b_qkv"], p["wo"], p["bo"],
      p["ln1_g"], p["ln1_b"])


def ffn_block(x, p):
    B, S, H = x.shape
    I = p["w1"].shape[1]
    return pl.pallas_call(
        _ffn_block_kernel(_LN_EPS),
        grid=(B,),
        in_specs=[
            _batch_spec(S, H),
            _whole_spec((H, I)),                                # w1 (bf16)
            _whole_spec((1, I)),                                # b1
            _whole_spec((I, H)),                                # w2 (bf16)
            _whole_spec((1, H)),                                # b2
            _whole_spec((1, H)),                                # ln2 gamma
            _whole_spec((1, H)),                                # ln2 beta
        ],
        out_specs=_batch_spec(S, H),
        out_shape=jax.ShapeDtypeStruct((B, S, H), ACT_DTYPE),
        compiler_params=_PARALLEL,
    )(x, p["w1"], p["b1"], p["w2"], p["b2"], p["ln2_g"], p["ln2_b"])


# ---------------------------------------------------------------------------
# Parameter initialization (deterministic, synthetic — no checkpoint load)
# ---------------------------------------------------------------------------

def _dense(key, fan_in, fan_out):
    w = jax.random.normal(key, (fan_in, fan_out), jnp.float32) * 0.02
    b = jnp.zeros((1, fan_out), jnp.float32)
    return w, b


def _ln_params(h):
    return jnp.ones((1, h), jnp.float32), jnp.zeros((1, h), jnp.float32)


def init_bert(key, cfg):
    H, I = cfg["hidden"], cfg["ffn"]
    keys = jax.random.split(key, 3 + 6 * cfg["layers"])
    params = {
        "word_emb": jax.random.normal(keys[0], (cfg["vocab"], H), jnp.float32) * 0.02,
        "pos_emb": jax.random.normal(keys[1], (cfg["max_pos"], H), jnp.float32) * 0.02,
        "type_emb": jax.random.normal(keys[2], (cfg["type_vocab"], H), jnp.float32) * 0.02,
    }
    params["emb_ln_g"], params["emb_ln_b"] = _ln_params(H)
    layers = []
    for l in range(cfg["layers"]):
        ks = keys[3 + 6 * l: 3 + 6 * (l + 1)]
        p = {}
        wq, _ = _dense(ks[0], H, H)
        wk, _ = _dense(ks[1], H, H)
        wv, _ = _dense(ks[2], H, H)
        # Fused QKV weight in bf16 (single MXU matmul per block).
        p["w_qkv"] = jnp.concatenate([wq, wk, wv], axis=1).astype(jnp.bfloat16)
        p["b_qkv"] = jnp.zeros((1, 3 * H), jnp.float32)
        wo, p["bo"] = _dense(ks[3], H, H)
        p["wo"] = wo.astype(jnp.bfloat16)
        p["ln1_g"], p["ln1_b"] = _ln_params(H)
        w1, p["b1"] = _dense(ks[4], H, I)
        w2, p["b2"] = _dense(ks[5], I, H)
        p["w1"] = w1.astype(jnp.bfloat16)
        p["w2"] = w2.astype(jnp.bfloat16)
        p["ln2_g"], p["ln2_b"] = _ln_params(H)
        layers.append(p)
    params["layers"] = layers
    return params


# ---------------------------------------------------------------------------
# BERT encoder built from the fused Pallas kernels
# ---------------------------------------------------------------------------

def bert_encoder(params, input_ids, attention_mask, token_type_ids, cfg):
    B, S = input_ids.shape
    pos_ids = jnp.arange(S)
    # Embedding gathers stay in XLA (no clean Pallas equivalent needed here).
    x = (params["word_emb"][input_ids]
         + params["pos_emb"][pos_ids][None, :, :]
         + params["type_emb"][token_type_ids]).astype(jnp.float32)       # [B,S,H]
    x = pallas_layernorm3d(x, params["emb_ln_g"], params["emb_ln_b"])
    mask_bias = ((1.0 - attention_mask.astype(jnp.float32)) * -1e9)[:, None, :]  # [B,1,S]
    for layer in params["layers"]:
        x = attention_block(x, mask_bias, layer, cfg["heads"])
        x = ffn_block(x, layer)
    return x                                                             # [B,S,H] bf16


# ---------------------------------------------------------------------------
# Tiny heads / losses kept in plain XLA (per perf review: dedicated
# pallas_calls for N=2 outputs are pure launch overhead / masked stores).
# ---------------------------------------------------------------------------

def _xla_layernorm(x, g, b, eps=_LN_EPS):
    x = x.astype(jnp.float32)
    mu = jnp.mean(x, axis=-1, keepdims=True)
    var = jnp.mean(jnp.square(x - mu), axis=-1, keepdims=True)
    return (x - mu) * jax.lax.rsqrt(var + eps) * g + b


def _cross_entropy(logits, labels):
    logp = jax.nn.log_softmax(logits, axis=-1)
    picked = jnp.take_along_axis(logp, labels[:, None], axis=-1)[:, 0]
    return -jnp.mean(picked)


def _cross_entropy_ignore(logits, labels, ignore_index):
    """PyTorch CrossEntropyLoss(ignore_index=...) semantics."""
    logp = jax.nn.log_softmax(logits, axis=-1)
    valid = labels != ignore_index
    safe = jnp.where(valid, labels, 0)
    picked = jnp.take_along_axis(logp, safe[:, None], axis=-1)[:, 0]
    num = jnp.sum(jnp.where(valid, -picked, 0.0))
    den = jnp.maximum(jnp.sum(valid.astype(jnp.float32)), 1.0)
    return num / den


# ---------------------------------------------------------------------------
# Pipeline_DP (JAX/Pallas version)
# ---------------------------------------------------------------------------

class PipelineDP:
    def __init__(self, cfg, key):
        self.cfg = cfg
        k_reader, k_retr, k_heads = jax.random.split(key, 3)

        # reader: BertForOrconvqaGlobal_DR_01-like (QA head + retrieval head)
        self.reader_bert = init_bert(k_reader, cfg)
        kh = jax.random.split(k_heads, 4)
        self.w_qa, self.b_qa = _dense(kh[0], cfg["hidden"], 2)        # num_qa_labels = 2
        self.w_pool, self.b_pool = _dense(kh[1], cfg["hidden"], cfg["hidden"])
        self.w_cls, self.b_cls = _dense(kh[2], cfg["hidden"], 2)      # num_retrieval_labels = 2
        # retriever: ANCE-style query encoder with embedding head + LN
        self.retriever_bert = init_bert(k_retr, cfg)
        self.w_emb, self.b_emb = _dense(kh[3], cfg["hidden"], cfg["emb_dim"])
        self.emb_ln_g, self.emb_ln_b = _ln_params(cfg["emb_dim"])

    # --- retriever branch: self.retriever(concat_ids, concat_id_mask) ------
    def _retriever_forward(self, concat_ids, concat_id_mask):
        cfg = self.cfg
        token_type_ids = jnp.zeros_like(concat_ids)
        seq = bert_encoder(self.retriever_bert, concat_ids, concat_id_mask,
                           token_type_ids, cfg)
        cls = seq[:, 0, :].astype(jnp.float32)                         # [B, H]
        emb = cls @ self.w_emb + self.b_emb                            # tiny head: XLA
        emb = _xla_layernorm(emb, self.emb_ln_g, self.emb_ln_b)
        return emb                                                     # [B, emb_dim]

    # --- reader branch ------------------------------------------------------
    def _reader_forward(self, input_ids, attention_mask, token_type_ids,
                        start_positions, end_positions, retrieval_label):
        cfg = self.cfg
        B, S = input_ids.shape
        seq = bert_encoder(self.reader_bert, input_ids, attention_mask,
                           token_type_ids, cfg)                        # [B, S, H]
        seq32 = seq.astype(jnp.float32)

        qa_logits = seq32 @ self.w_qa + self.b_qa                      # [B, S, 2] (XLA head)
        start_logits = qa_logits[:, :, 0]
        end_logits = qa_logits[:, :, 1]

        cls = seq32[:, 0, :]
        pooled = jnp.tanh(cls @ self.w_pool + self.b_pool)
        retrieval_logits = pooled @ self.w_cls + self.b_cls            # [B, 2]

        if start_positions is None or end_positions is None or retrieval_label is None:
            return start_logits, end_logits, retrieval_logits

        # TODO(synk): exact return signature of BertForOrconvqaGlobal_DR_01 is
        # not available; loss composition mirrors BertForOrconvqaGlobal with
        # qa_loss_factor = retrieval_loss_factor = 1.0 and ignore_index = S.
        ignored_index = S
        sp = jnp.clip(start_positions, 0, ignored_index)
        ep = jnp.clip(end_positions, 0, ignored_index)
        start_loss = _cross_entropy_ignore(start_logits, sp, ignored_index)
        end_loss = _cross_entropy_ignore(end_logits, ep, ignored_index)
        retrieval_loss = _cross_entropy(retrieval_logits, retrieval_label.reshape(-1))
        qa_loss = (start_loss + end_loss) / 2.0
        total_loss = 1.0 * qa_loss + 1.0 * retrieval_loss
        return total_loss, start_logits, end_logits, retrieval_logits

    # --- Pipeline_DP.forward -------------------------------------------------
    def __call__(self, encoder_name, concat_ids=None, concat_id_mask=None,
                 input_ids=None, attention_mask=None, token_type_ids=None,
                 start_positions=None, end_positions=None, retrieval_label=None):
        if encoder_name == "retriever":
            return self._retriever_forward(concat_ids, concat_id_mask)
        return self._reader_forward(input_ids, attention_mask, token_type_ids,
                                    start_positions, end_positions, retrieval_label)


# ---------------------------------------------------------------------------
# Demo
# ---------------------------------------------------------------------------

if __name__ == "__main__":
    cfg = dict(vocab=128, hidden=32, heads=2, ffn=64, layers=2,
               max_pos=16, type_vocab=2, emb_dim=32)
    B, S = 2, 8

    key = jax.random.PRNGKey(0)
    k_model, k_data = jax.random.split(key)
    model = PipelineDP(cfg, k_model)

    k1, k2, k3, k4, k5 = jax.random.split(k_data, 5)
    concat_ids = jax.random.randint(k1, (B, S), 0, cfg["vocab"], dtype=jnp.int32)
    concat_id_mask = jnp.ones((B, S), jnp.int32)
    input_ids = jax.random.randint(k2, (B, S), 0, cfg["vocab"], dtype=jnp.int32)
    attention_mask = jnp.ones((B, S), jnp.int32)
    token_type_ids = jnp.zeros((B, S), jnp.int32)
    start_positions = jax.random.randint(k3, (B,), 0, S, dtype=jnp.int32)
    end_positions = jax.random.randint(k4, (B,), 0, S, dtype=jnp.int32)
    retrieval_label = jax.random.randint(k5, (B,), 0, 2, dtype=jnp.int32)

    # retriever branch
    q_emb = model("retriever", concat_ids=concat_ids, concat_id_mask=concat_id_mask)
    jax.block_until_ready(q_emb)
    assert q_emb.shape == (B, cfg["emb_dim"])

    # reader branch (with labels -> loss + logits)
    total_loss, start_logits, end_logits, retrieval_logits = model(
        "reader", input_ids=input_ids, attention_mask=attention_mask,
        token_type_ids=token_type_ids, start_positions=start_positions,
        end_positions=end_positions, retrieval_label=retrieval_label)
    jax.block_until_ready((total_loss, start_logits, end_logits, retrieval_logits))
    assert start_logits.shape == (B, S) and end_logits.shape == (B, S)
    assert retrieval_logits.shape == (B, 2)
    assert jnp.isfinite(total_loss)

    print("KERNEL_OK")
</pallas_src>

<mosaic_0001>
module attributes {stable_mosaic.version = 11 : i64} {
  func.func @kernel(%arg0: i32, %arg1: memref<1x8x32xf32, #tpu.memory_space<vmem>>, %arg2: memref<1x32xf32, #tpu.memory_space<vmem>>, %arg3: memref<1x32xf32, #tpu.memory_space<vmem>>, %arg4: memref<1x8x32xbf16, #tpu.memory_space<vmem>>) attributes {dimension_semantics = [#tpu.dimension_semantics<parallel>], iteration_bounds = array<i64: 2>, scalar_prefetch = 0 : i64, scratch_operands = 0 : i64, tpu.core_type = #tpu.core_type<tc>, window_params = [{transform_indices = @transform_0, window_bounds = array<i64: 1, 8, 32>}, {pipeline_mode = #tpu.pipeline_mode<synchronous>, transform_indices = @transform_1, window_bounds = array<i64: 1, 32>}, {pipeline_mode = #tpu.pipeline_mode<synchronous>, transform_indices = @transform_2, window_bounds = array<i64: 1, 32>}, {transform_indices = @transform_3, window_bounds = array<i64: 1, 8, 32>}]} {
    %c0 = arith.constant 0 : index
    %c0_0 = arith.constant 0 : index
    %c0_1 = arith.constant 0 : index
    %0 = vector.load %arg1[%c0, %c0_0, %c0_1] : memref<1x8x32xf32, #tpu.memory_space<vmem>>, vector<1x8x32xf32>
    %1 = vector.shape_cast %0 : vector<1x8x32xf32> to vector<8x32xf32>
    %cst = arith.constant dense<0.000000e+00> : vector<8xf32>
    %2 = vector.multi_reduction <add>, %1, %cst [1] : vector<8x32xf32> to vector<8xf32>
    %3 = vector.shape_cast %2 : vector<8xf32> to vector<8x1xf32>
    %cst_2 = arith.constant 3.200000e+01 : f32
    %4 = vector.broadcast %cst_2 : f32 to vector<8x1xf32>
    %5 = arith.divf %3, %4 : vector<8x1xf32>
    %6 = vector.broadcast %5 : vector<8x1xf32> to vector<8x32xf32>
    %7 = arith.subf %1, %6 : vector<8x32xf32>
    %8 = arith.mulf %7, %7 : vector<8x32xf32>
    %cst_3 = arith.constant dense<0.000000e+00> : vector<8xf32>
    %9 = vector.multi_reduction <add>, %8, %cst_3 [1] : vector<8x32xf32> to vector<8xf32>
    %10 = vector.shape_cast %9 : vector<8xf32> to vector<8x1xf32>
    %cst_4 = arith.constant 3.200000e+01 : f32
    %11 = vector.broadcast %cst_4 : f32 to vector<8x1xf32>
    %12 = arith.divf %10, %11 : vector<8x1xf32>
    %13 = vector.broadcast %5 : vector<8x1xf32> to vector<8x32xf32>
    %14 = arith.subf %1, %13 : vector<8x32xf32>
    %cst_5 = arith.constant 9.99999996E-13 : f32
    %15 = vector.broadcast %cst_5 : f32 to vector<8x1xf32>
    %16 = arith.addf %12, %15 : vector<8x1xf32>
    %17 = math.rsqrt %16 : vector<8x1xf32>
    %18 = vector.broadcast %17 : vector<8x1xf32> to vector<8x32xf32>
    %19 = arith.mulf %14, %18 : vector<8x32xf32>
    %c0_6 = arith.constant 0 : index
    %c0_7 = arith.constant 0 : index
    %20 = vector.load %arg2[%c0_6, %c0_7] : memref<1x32xf32, #tpu.memory_space<vmem>>, vector<1x32xf32>
    %21 = vector.broadcast %20 : vector<1x32xf32> to vector<8x32xf32>
    %22 = arith.mulf %19, %21 : vector<8x32xf32>
    %c0_8 = arith.constant 0 : index
    %c0_9 = arith.constant 0 : index
    %23 = vector.load %arg3[%c0_8, %c0_9] : memref<1x32xf32, #tpu.memory_space<vmem>>, vector<1x32xf32>
    %24 = vector.broadcast %23 : vector<1x32xf32> to vector<8x32xf32>
    %25 = arith.addf %22, %24 : vector<8x32xf32>
    %26 = arith.truncf %25 : vector<8x32xf32> to vector<8x32xbf16>
    %c0_10 = arith.constant 0 : index
    %c0_11 = arith.constant 0 : index
    %c0_12 = arith.constant 0 : index
    %27 = vector.load %arg4[%c0_10, %c0_11, %c0_12] : memref<1x8x32xbf16, #tpu.memory_space<vmem>>, vector<1x8x32xbf16>
    %28 = vector.shape_cast %27 : vector<1x8x32xbf16> to vector<8x32xbf16>
    %29 = vector.shape_cast %26 : vector<8x32xbf16> to vector<1x8x32xbf16>
    tpu.vector_store %arg4[%c0_10, %c0_11, %c0_12], %29 {strides = array<i32>} : memref<1x8x32xbf16, #tpu.memory_space<vmem>>, vector<1x8x32xbf16>,
    return
  }
  func.func @transform_0(%arg0: i32) -> (i32, i32, i32) {
    %c0_i32 = arith.constant 0 : i32
    %c0_i32_0 = arith.constant 0 : i32
    %c0_i32_1 = arith.constant 0 : i32
    return %arg0, %c0_i32, %c0_i32_0 : i32, i32, i32
  }
  func.func @transform_1(%arg0: i32) -> (i32, i32) {
    %c0_i32 = arith.constant 0 : i32
    %c0_i32_0 = arith.constant 0 : i32
    %c0_i32_1 = arith.constant 0 : i32
    return %c0_i32, %c0_i32_0 : i32, i32
  }
  func.func @transform_2(%arg0: i32) -> (i32, i32) {
    %c0_i32 = arith.constant 0 : i32
    %c0_i32_0 = arith.constant 0 : i32
    %c0_i32_1 = arith.constant 0 : i32
    return %c0_i32, %c0_i32_0 : i32, i32
  }
  func.func @transform_3(%arg0: i32) -> (i32, i32, i32) {
    %c0_i32 = arith.constant 0 : i32
    %c0_i32_0 = arith.constant 0 : i32
    %c0_i32_1 = arith.constant 0 : i32
    return %arg0, %c0_i32, %c0_i32_0 : i32, i32, i32
  }
}

</mosaic_0001>

<llo_original>
// kernel: tpu_custom_call.1
$region0: #{tpu_custom_call.1}
  #allocation0 [shape = 'u32[]', space=smem, size = 0x4, offset = 0x4, fixed_abs, tag = 'smem constant byte address 0x4 - core index']
  #allocation1 [shape = 'u32[144,128]{1,0:T(1,128)}', space=vmem, size = 0x12000, scoped, tag = 'internal scratch']
  %s0 = inlined_call_operand.hbm [shape: f32[2,8,32], index: 0, kind: input, shape index: {}]
  %s1 = inlined_call_operand.vmem [shape: f32[1,32], index: 1, kind: input, shape index: {}]
  %s2 = inlined_call_operand.vmem [shape: f32[1,32], index: 2, kind: input, shape index: {}]
  %s3 = inlined_call_operand.hbm [shape: bf16[2,8,32], index: 3, kind: output, shape index: {}]
  %s4 = sld [smem:[#allocation0]]
  $region49: #{tpu_custom_call.1} parent=0
    _
  %s6 = ssub.s32 1, %s4
  %s7 = scalar_select 0, %s6, %s4
  $region1: #{tpu_custom_call.1} parent=0
    #allocation2 [shape = 'u8[8192]{0}', space=vmem, size = 0x2000, scoped, tag = 'input window, operand 0']
    #allocation3 [shape = 's32[2]{0}', space=sflag, size = 0x8, scoped, tag = 'scoped memory for tpu_custom_call.1']
    #allocation4 [shape = 's32[2]{0}', space=sflag, size = 0x8, scoped, tag = 'scoped memory for tpu_custom_call.1']
    #allocation5 [shape = 'u8[4096]{0}', space=vmem, size = 0x1000, scoped, tag = 'output window, operand 0']
    %8 = vsyncpa [#allocation3], 0
    %s9 = scalar_lea.sflag [#allocation3], 1
    %10 = vsyncpa %s9, 0
    %11 = vsyncpa [#allocation4], 0
    %s12 = scalar_lea.sflag [#allocation4], 1
    %13 = vsyncpa %s12, 0
    loop: start=0, step=1, limit=4
    $region2: #{tpu_custom_call.1} parent=1 // loop_pre_header
      _
    $region3: #{tpu_custom_call.1} parent=1 // loop_header
      %s15 = sphi 0, %s19
      %p16 = scmp.ge.s32.totalorder %s15, 4
      %s25 = sphi 0, %s27
      %s28 = sphi 0, %s25
      %s29 = sphi 0, %s28
      %s45 = sphi 0, %s29
      %s49 = sphi 0, %s49
      %s51 = sphi 0, %s49
      %s52 = sphi 0, %s51
      %s66 = sphi 0, %s52
      %s70 = sphi 0, %s70
      %s72 = sphi 0, %s70
      %s73 = sphi 0, %s72
      %s87 = sphi 0, %s73
      %s93 = sphi 0, %s95
      %s96 = sphi 0, %s93
      %s97 = sphi 0, %s96
      %s113 = sphi 0, %s97
    $region4: #{tpu_custom_call.1} parent=1 // loop_header_branch
      %18 = sbr.rel (%p16) target = $region8
    $region5: #{tpu_custom_call.1} parent=1 // loop_body
      %s20 = ssub.s32 %s15, 1
      %s21 = ssub.s32 %s15, 2
      %s22 = sadd.s32 %s15, 1
      %s23 = ssub.s32 %s15, %s22
      %p24 = scmp.eq.s32.totalorder %s23, 0
      %s26 = sadd.s32 %s25, 1
      %s27 = scalar_select %p24, %s25, %s26
      %p30 = pneg %p24
      %p31 = scmp.eq.s32.totalorder %s15, 1
      %p32 = por %p30, %p31
      %p33 = scmp.ne.s32.totalorder %s25, %s28
      %p34 = scmp.eq.s32.totalorder %s15, 0
      %p35 = por %p33, %p34
      %p36 = scmp.ne.s32.totalorder %s25, %s28
      %p37 = scmp.eq.s32.totalorder %s20, 1
      %p38 = por %p36, %p37
      %p39 = scmp.ne.s32.totalorder %s28, %s29
      %p40 = scmp.eq.s32.totalorder %s20, 0
      %p41 = por %p39, %p40
      %p42 = scmp.ne.s32.totalorder %s28, %s29
      %p43 = scmp.eq.s32.totalorder %s21, 1
      %p44 = por %p42, %p43
      %p46 = scmp.ne.s32.totalorder %s29, %s45
      %p47 = scmp.eq.s32.totalorder %s21, 0
      %p48 = por %p46, %p47
      %s50 = sadd.s32 %s49, 1
      %p53 = scmp.eq.s32.totalorder %s15, 1
      %p54 = scmp.ne.s32.totalorder %s49, %s51
      %p55 = scmp.eq.s32.totalorder %s15, 0
      %p56 = por %p54, %p55
      %p57 = scmp.ne.s32.totalorder %s49, %s51
      %p58 = scmp.eq.s32.totalorder %s20, 1
      %p59 = por %p57, %p58
      %p60 = scmp.ne.s32.totalorder %s51, %s52
      %p61 = scmp.eq.s32.totalorder %s20, 0
      %p62 = por %p60, %p61
      %p63 = scmp.ne.s32.totalorder %s51, %s52
      %p64 = scmp.eq.s32.totalorder %s21, 1
      %p65 = por %p63, %p64
      %p67 = scmp.ne.s32.totalorder %s52, %s66
      %p68 = scmp.eq.s32.totalorder %s21, 0
      %p69 = por %p67, %p68
      %s71 = sadd.s32 %s70, 1
      %p74 = scmp.eq.s32.totalorder %s15, 1
      %p75 = scmp.ne.s32.totalorder %s70, %s72
      %p76 = scmp.eq.s32.totalorder %s15, 0
      %p77 = por %p75, %p76
      %p78 = scmp.ne.s32.totalorder %s70, %s72
      %p79 = scmp.eq.s32.totalorder %s20, 1
      %p80 = por %p78, %p79
      %p81 = scmp.ne.s32.totalorder %s72, %s73
      %p82 = scmp.eq.s32.totalorder %s20, 0
      %p83 = por %p81, %p82
      %p84 = scmp.ne.s32.totalorder %s72, %s73
      %p85 = scmp.eq.s32.totalorder %s21, 1
      %p86 = por %p84, %p85
      %p88 = scmp.ne.s32.totalorder %s73, %s87
      %p89 = scmp.eq.s32.totalorder %s21, 0
      %p90 = por %p88, %p89
      %s91 = ssub.s32 %s15, %s22
      %p92 = scmp.eq.s32.totalorder %s91, 0
      %s94 = sadd.s32 %s93, 1
      %s95 = scalar_select %p92, %s93, %s94
      %p98 = pneg %p92
      %p99 = scmp.eq.s32.totalorder %s15, 1
      %p100 = por %p98, %p99
      %p101 = scmp.ne.s32.totalorder %s93, %s96
      %p102 = scmp.eq.s32.totalorder %s15, 0
      %p103 = por %p101, %p102
      %p104 = scmp.ne.s32.totalorder %s93, %s96
      %p105 = scmp.eq.s32.totalorder %s20, 1
      %p106 = por %p104, %p105
      %p107 = scmp.ne.s32.totalorder %s96, %s97
      %p108 = scmp.eq.s32.totalorder %s20, 0
      %p109 = por %p107, %p108
      %p110 = scmp.ne.s32.totalorder %s96, %s97
      %p111 = scmp.eq.s32.totalorder %s21, 1
      %p112 = por %p110, %p111
      %p114 = scmp.ne.s32.totalorder %s97, %s113
      %p115 = scmp.eq.s32.totalorder %s21, 0
      %p116 = por %p114, %p115
      %p117 = scmp.le.s32.totalorder 1, %s15
      %p118 = scmp.lt.s32.totalorder %s15, 3
      %p119 = pnand %p117, %p118
      %p120 = pneg %p119
      // Predicated region
      $region9: #{tpu_custom_call.1} parent=5 // pred_check
        _
      $region10: #{tpu_custom_call.1} parent=5 // pred_check_branch
        %122 = sbr.rel (%p119) target = $region12
      $region11: #{tpu_custom_call.1} parent=5 // pred_region
        %s123 = ssub.s32 %s15, 1
        // Predicated region
        $region13: #{tpu_custom_call.1} parent=11 // pred_check
          %p124 = pneg %p62
        $region14: #{tpu_custom_call.1} parent=11 // pred_check_branch
          %126 = sbr.rel (%p124) target = $region16
        $region15: #{tpu_custom_call.1} parent=11 // pred_region
          _
        $region16: #{tpu_custom_call.1} parent=11 // pred_fallthru
          _
        // Predicated region
        $region17: #{tpu_custom_call.1} parent=11 // pred_check
          %p127 = pneg %p83
        $region18: #{tpu_custom_call.1} parent=11 // pred_check_branch
          %129 = sbr.rel (%p127) target = $region20
        $region19: #{tpu_custom_call.1} parent=11 // pred_region
          _
        $region20: #{tpu_custom_call.1} parent=11 // pred_fallthru
          _
      $region12: #{tpu_custom_call.1} parent=5 // pred_fallthru
        _
      %p130 = scmp.lt.s32.totalorder %s15, 2
      // Predicated region
      $region21: #{tpu_custom_call.1} parent=5 // pred_check
        %p131 = pneg %p130
      $region22: #{tpu_custom_call.1} parent=5 // pred_check_branch
        %133 = sbr.rel (%p131) target = $region24
      $region23: #{tpu_custom_call.1} parent=5 // pred_region
        // Predicated region
        $region25: #{tpu_custom_call.1} parent=23 // pred_check
          %p134 = pneg %p35
        $region26: #{tpu_custom_call.1} parent=23 // pred_check_branch
          %136 = sbr.rel (%p134) target = $region28
        $region27: #{tpu_custom_call.1} parent=23 // pred_region
          %s137 = sand.u32 %s25, 1
          %s138 = scalar_lea.sflag [#allocation3], %s137
          %s139 = sand.u32 %s25, 1
          %s140 = smul.addr %s139, 8
          %s141 = scalar_lea.vmem [#allocation2], %s140
          %s143 = ssub.s32 128, 128
          %144 = vsyncadd %s138, %s143
          %s145 = smul.addr %s15, 128
          %s146 = scalar_lea.hbm %s0, %s145
          %s148 = sshll.u32 %s141, 4
          %s149 = int_to_ptr.vmem [resolvable:$true] %s148
          %151 = dma.hbm_to_vmem [thread:$0]  %s146, 128, %s149, %s138
        $region28: #{tpu_custom_call.1} parent=23 // pred_fallthru
          _
      $region24: #{tpu_custom_call.1} parent=5 // pred_fallthru
        _
      %p152 = scmp.le.s32.totalorder 1, %s15
      %p153 = scmp.lt.s32.totalorder %s15, 3
      %p154 = pnand %p152, %p153
      %p155 = pneg %p154
      // Predicated region
      $region29: #{tpu_custom_call.1} parent=5 // pred_check
        _
      $region30: #{tpu_custom_call.1} parent=5 // pred_check_branch
        %157 = sbr.rel (%p154) target = $region32
      $region31: #{tpu_custom_call.1} parent=5 // pred_region
        %s158 = ssub.s32 %s15, 1
        %s159 = sand.u32 %s28, 1
        %s160 = scalar_lea.sflag [#allocation3], %s159
        %s161 = sand.u32 %s28, 1
        %s162 = smul.addr %s161, 8
        %s163 = scalar_lea.vmem [#allocation2], %s162
        // Predicated region
        $region33: #{tpu_custom_call.1} parent=31 // pred_check
          %p164 = pneg %p41
        $region34: #{tpu_custom_call.1} parent=31 // pred_check_branch
          %166 = sbr.rel (%p164) target = $region36
        $region35: #{tpu_custom_call.1} parent=31 // pred_region
          %167 = dma.done %s160, 128
        $region36: #{tpu_custom_call.1} parent=31 // pred_fallthru
          _
        %s168 = sand.u32 %s28, 1
        %s169 = scalar_lea.sflag [#allocation3], %s168
        %s170 = sand.u32 %s28, 1
        %s171 = smul.addr %s170, 8
        %s172 = scalar_lea.vmem [#allocation2], %s171
        %p173 = pneg %p41
        %p174 = pneg %p38
        %p175 = pneg %p62
        %p176 = pneg %p59
        %p177 = pneg %p83
        %p178 = pneg %p80
        %p179 = pneg %p109
        %p180 = pneg %p106
        %s181 = sand.u32 %s96, 1
        %s182 = scalar_lea.sflag [#allocation4], %s181
        %s183 = sand.u32 %s96, 1
        %s184 = smul.addr %s183, 4
        %s185 = scalar_lea.vmem [#allocation5], %s184
        %v186 = vld [vmem:[%s163] sm:$0xff]
        %vm187 = vcmask 261120
        %v188 = vsel %vm187, %v186, 0.0
        %189 = vadd.xlane.f32.xlu0 %v188
        %v190 = vpop.xlane.xlu0 %189
        %v191 = vrcp.pop 32.0
        %v192 = vmul.f32 %v190, %v191
        %v193 = vsub.f32 %v186, %v192
        %v194 = vmul.f32 %v193, %v193
        %v195 = vsel %vm187, %v194, 0.0
        %196 = vadd.xlane.f32.xlu0 %v195
        %v197 = vpop.xlane.xlu0 %196
        %v198 = vmul.f32 %v197, %v191
        %v199 = vadd.f32 %v198, 1e-12
        %v200 = vrsqrt.pop %v199
        %v201 = vmul.f32 %v193, %v200
        %v202 = vld [vmem:[%s1] sm:$0x1]
        %v204 = vlaneseq
        %v205 = vshrl.u32 %v204, 7
        %v206 = vsub.s32 0, %v205
        %v207 = vrot.slane %v202, %v206
        %v209 = vmul.f32 %v201, %v207
        %v210 = vld [vmem:[%s2] sm:$0x1]
        %v212 = vlaneseq
        %v213 = vshrl.u32 %v212, 7
        %v214 = vsub.s32 0, %v213
        %v215 = vrot.slane %v210, %v214
        %v217 = vadd.f32 %v209, %v215
        %v218 = vpack.c.bf16 %v217, %v217
        %vm219 = vcmask 257024
        %220 = vst.msk [vmem:[%s185] sm:$0xf] %vm219, %v218
        %s221 = sand.u32 %s96, 1
        %s222 = scalar_lea.sflag [#allocation4], %s221
        %s223 = sand.u32 %s96, 1
        %s224 = smul.addr %s223, 4
        %s225 = scalar_lea.vmem [#allocation5], %s224
        // Predicated region
        $region37: #{tpu_custom_call.1} parent=31 // pred_check
          %p226 = pneg %p106
        $region38: #{tpu_custom_call.1} parent=31 // pred_check_branch
          %228 = sbr.rel (%p226) target = $region40
        $region39: #{tpu_custom_call.1} parent=31 // pred_region
          %s230 = ssub.s32 64, 64
          %231 = vsyncadd %s222, %s230
          %s232 = smul.addr %s20, 64
          %s233 = scalar_lea.hbm %s3, %s232
          %s235 = sshll.u32 %s225, 4
          %s236 = int_to_ptr.vmem [resolvable:$true] %s235
          %238 = dma.vmem_to_hbm [thread:$0]  %s236, 64, %s233, %s222
        $region40: #{tpu_custom_call.1} parent=31 // pred_fallthru
          _
      $region32: #{tpu_custom_call.1} parent=5 // pred_fallthru
        _
      %p239 = scmp.le.s32.totalorder 2, %s15
      // Predicated region
      $region41: #{tpu_custom_call.1} parent=5 // pred_check
        %p240 = pneg %p239
      $region42: #{tpu_custom_call.1} parent=5 // pred_check_branch
        %242 = sbr.rel (%p240) target = $region44
      $region43: #{tpu_custom_call.1} parent=5 // pred_region
        %s243 = ssub.s32 %s15, 2
        // Predicated region
        $region45: #{tpu_custom_call.1} parent=43 // pred_check
          %p244 = pneg %p112
        $region46: #{tpu_custom_call.1} parent=43 // pred_check_branch
          %246 = sbr.rel (%p244) target = $region48
        $region47: #{tpu_custom_call.1} parent=43 // pred_region
          %s247 = sand.u32 %s97, 1
          %s248 = scalar_lea.sflag [#allocation4], %s247
          %s249 = sand.u32 %s97, 1
          %s250 = smul.addr %s249, 4
          %s251 = scalar_lea.vmem [#allocation5], %s250
          %252 = dma.done %s248, 64
        $region48: #{tpu_custom_call.1} parent=43 // pred_fallthru
          _
      $region44: #{tpu_custom_call.1} parent=5 // pred_fallthru
        _
    $region6: #{tpu_custom_call.1} parent=1 // loop_footer
      %s19 = sadd.s32 1, %s15
    $region7: #{tpu_custom_call.1} parent=1 // loop_footer_branch
      %14 = sbr.rel target = $region3
    $region8: #{tpu_custom_call.1} parent=1 // loop_exit
      _
    %253 = vsyncpa [#allocation3], 1
    %s254 = scalar_lea.sflag [#allocation3], 1
    %255 = vsyncpa %s254, 1
    %256 = vsyncpa [#allocation4], 1
    %s257 = scalar_lea.sflag [#allocation4], 1
    %258 = vsyncpa %s257, 1

</llo_original>
